<compile_context>
chip_gen: v6e
topology: v6e:2x2x1
jax: 0.10.0
libtpu: 0.0.40
codegen_flags: <defaults>
</compile_context>

<pallas_src>
import jax
import jax.numpy as jnp
from jax.experimental import pallas as pl
from jax.experimental.pallas import tpu as pltpu


_ROW_TILE = 256     # sublane-dim tile target (multiple of 8)
_LANE_TILE = 1024   # lane-dim tile target (multiple of 128)


# ----------------------------- kernels --------------------------------------

def _weighted_sum_kernel(w_ref, pet_ref, ct_ref, out_ref):
    # w_ref: (2,) float32 scalars in SMEM.  out = w[0]*pet + w[1]*ct.
    out_ref[...] = (w_ref[0] * pet_ref[...]
                    + w_ref[1] * ct_ref[...]).astype(out_ref.dtype)


def _multiply_kernel(pet_ref, ct_ref, out_ref):
    out_ref[...] = (pet_ref[...] * ct_ref[...]).astype(out_ref.dtype)


def _concat_kernel(pet_ref, ct_ref, out_ref):
    # pet/ct blocks: (TC, TL); out block: (2, TC, TL).
    # Pure data movement: each half is a direct full-block store.
    out_ref[0] = pet_ref[...]
    out_ref[1] = ct_ref[...]


# --------------------------- tiling helpers ----------------------------------

def _dense_2d_shape(total):
    """Pick a lane-dense 2-D slab (rows, lanes) for `total` flat elements.
    Prefer wide lanes, but keep rows >= 8 so sublanes fill too."""
    candidates = [l for l in (1024, 512, 256, 128) if total % l == 0]
    if not candidates:
        return None
    for lanes in candidates:
        if total // lanes >= 8:
            return total // lanes, lanes
    lanes = candidates[-1]            # smallest dividing 128-multiple
    return total // lanes, lanes


def _tile_sizes(rows, cols):
    # Block dims must be divisible by (8, 128) OR equal the full array dims.
    tr = rows if rows <= _ROW_TILE else _ROW_TILE     # _ROW_TILE % 8 == 0
    tl = cols if cols <= _LANE_TILE else _LANE_TILE   # _LANE_TILE % 128 == 0
    return tr, tl


# --------------------------- pallas_call glue --------------------------------

def _elementwise_call(kernel, pet, ct, weights=None):
    """Run an elementwise fusion kernel over a dense 2-D tiling of the data."""
    shape = pet.shape
    total = pet.size
    out_dtype = jnp.result_type(pet.dtype, ct.dtype)

    dense = _dense_2d_shape(total)
    if dense is not None:
        rows, cols = dense
    else:
        # Fallback: (N*C, H*W).  Partial trailing blocks are masked by Pallas.
        rows = shape[0] * shape[1]
        cols = shape[2] * shape[3]
    p2 = pet.reshape(rows, cols)
    c2 = ct.reshape(rows, cols)

    tr, tl = _tile_sizes(rows, cols)
    grid = (pl.cdiv(rows, tr), pl.cdiv(cols, tl))
    data_spec = pl.BlockSpec((tr, tl), lambda i, j: (i, j))

    in_specs, args = [], []
    if weights is not None:
        # float32 scalar weights live whole in SMEM (32-bit scalar memory).
        in_specs.append(pl.BlockSpec(memory_space=pltpu.SMEM))
        args.append(weights)
    in_specs += [data_spec, data_spec]
    args += [p2, c2]

    itemsize = jnp.dtype(out_dtype).itemsize
    out = pl.pallas_call(
        kernel,
        out_shape=jax.ShapeDtypeStruct((rows, cols), out_dtype),
        grid=grid,
        in_specs=in_specs,
        out_specs=pl.BlockSpec((tr, tl), lambda i, j: (i, j)),
        compiler_params=pltpu.CompilerParams(
            dimension_semantics=("parallel", "parallel")),
        cost_estimate=pl.CostEstimate(
            flops=3 * total, transcendentals=0,
            bytes_accessed=3 * total * itemsize),
    )(*args)
    return out.reshape(shape)


def _concat_call(pet, ct):
    """Channel concat via two direct block stores into an (N, 2, C, HW) view."""
    N, C, H, W = pet.shape
    HW = H * W
    out_dtype = jnp.result_type(pet.dtype, ct.dtype)
    p3 = pet.reshape(N, C, HW).astype(out_dtype)
    c3 = ct.reshape(N, C, HW).astype(out_dtype)

    tc = C if C <= _ROW_TILE else _ROW_TILE
    tl = HW if HW <= _LANE_TILE else _LANE_TILE
    grid = (N, pl.cdiv(C, tc), pl.cdiv(HW, tl))

    in_spec = pl.BlockSpec((pl.Squeezed(), tc, tl),
                           lambda n, c, l: (n, c, l))
    out_spec = pl.BlockSpec((pl.Squeezed(), 2, tc, tl),
                            lambda n, c, l: (n, 0, c, l))

    itemsize = jnp.dtype(out_dtype).itemsize
    out = pl.pallas_call(
        _concat_kernel,
        out_shape=jax.ShapeDtypeStruct((N, 2, C, HW), out_dtype),
        grid=grid,
        in_specs=[in_spec, in_spec],
        out_specs=out_spec,
        compiler_params=pltpu.CompilerParams(
            dimension_semantics=("parallel", "parallel", "parallel")),
        cost_estimate=pl.CostEstimate(
            flops=0, transcendentals=0,
            bytes_accessed=4 * N * C * HW * itemsize),
    )(p3, c3)
    return out.reshape(N, 2 * C, H, W)


# ------------------------------ module ---------------------------------------

class ImageFusion:
    """JAX/Pallas port of the PyTorch ImageFusion module (forward pass)."""

    def __init__(self, mode='concat'):
        self.mode = mode
        if mode == 'pet_weighted':
            self.weights = [0.8, 0.2]
            self.mode = 'average'
        elif mode == 'ct_weighted':
            self.weights = [0.2, 0.8]
            self.mode = 'average'
        else:
            self.weights = [0.5, 0.5]
        if self.mode == 'adaptive':
            # TODO(synk): alpha/beta are plain scalars, not trainable
            # parameters (no gradient flow) — forward value matches
            # nn.Parameter(torch.tensor(0.5)).
            self.alpha = jnp.float32(0.5)
            self.beta = jnp.float32(0.5)

    def __call__(self, pet, ct):
        if self.mode == 'concat':
            return _concat_call(pet, ct)
        elif self.mode == 'average':
            w = jnp.asarray(self.weights, dtype=jnp.float32)
            return _elementwise_call(_weighted_sum_kernel, pet, ct, weights=w)
        elif self.mode == 'adaptive':
            w = jnp.stack([self.alpha, self.beta]).astype(jnp.float32)
            return _elementwise_call(_weighted_sum_kernel, pet, ct, weights=w)
        elif self.mode == 'multiply':
            return _elementwise_call(_multiply_kernel, pet, ct)
        else:
            raise NotImplementedError('Fusion mode not implemented!')


# ------------------------------ test ------------------------------------------

if __name__ == "__main__":
    key = jax.random.PRNGKey(0)
    k_pet, k_ct = jax.random.split(key)
    # NCHW, small shapes consistent with an image-fusion forward pass.
    pet = jax.random.normal(k_pet, (2, 4, 16, 16), dtype=jnp.float32)
    ct = jax.random.normal(k_ct, (2, 4, 16, 16), dtype=jnp.float32)

    # Pure-JAX references for every fusion mode.
    refs = {
        'concat': jnp.concatenate([pet, ct], axis=1),
        'average': 0.5 * pet + 0.5 * ct,
        'pet_weighted': 0.8 * pet + 0.2 * ct,
        'ct_weighted': 0.2 * pet + 0.8 * ct,
        'adaptive': 0.5 * pet + 0.5 * ct,
        'multiply': pet * ct,
    }

    ok = True
    for mode, ref in refs.items():
        fuser = ImageFusion(mode=mode)
        out = jax.block_until_ready(fuser(pet, ct))
        if out.shape != ref.shape or out.dtype != ref.dtype:
            ok = False
            break
        if not jnp.allclose(out, ref, atol=1e-6, rtol=1e-6):
            ok = False
            break

    if ok:
        print("KERNEL_OK")
</pallas_src>

<mosaic_0001>
module attributes {stable_mosaic.version = 11 : i64} {
  func.func @_concat_kernel(%arg0: i32, %arg1: i32, %arg2: i32, %arg3: memref<1x4x256xf32, #tpu.memory_space<vmem>>, %arg4: memref<1x4x256xf32, #tpu.memory_space<vmem>>, %arg5: memref<1x2x4x256xf32, #tpu.memory_space<vmem>>) attributes {dimension_semantics = [#tpu.dimension_semantics<parallel>, #tpu.dimension_semantics<parallel>, #tpu.dimension_semantics<parallel>], iteration_bounds = array<i64: 2, 1, 1>, scalar_prefetch = 0 : i64, scratch_operands = 0 : i64, tpu.core_type = #tpu.core_type<tc>, window_params = [{transform_indices = @transform_0, window_bounds = array<i64: 1, 4, 256>}, {transform_indices = @transform_1, window_bounds = array<i64: 1, 4, 256>}, {transform_indices = @transform_2, window_bounds = array<i64: 1, 2, 4, 256>}]} {
    %c0 = arith.constant 0 : index
    %c0_0 = arith.constant 0 : index
    %c0_1 = arith.constant 0 : index
    %0 = vector.load %arg3[%c0, %c0_0, %c0_1] : memref<1x4x256xf32, #tpu.memory_space<vmem>>, vector<1x4x256xf32>
    %1 = vector.shape_cast %0 : vector<1x4x256xf32> to vector<4x256xf32>
    %c0_2 = arith.constant 0 : index
    %c0_3 = arith.constant 0 : index
    %c0_4 = arith.constant 0 : index
    %c0_5 = arith.constant 0 : index
    %2 = vector.load %arg5[%c0_2, %c0_3, %c0_4, %c0_5] : memref<1x2x4x256xf32, #tpu.memory_space<vmem>>, vector<1x1x4x256xf32>
    %3 = vector.shape_cast %2 : vector<1x1x4x256xf32> to vector<4x256xf32>
    %4 = vector.shape_cast %1 : vector<4x256xf32> to vector<1x1x4x256xf32>
    tpu.vector_store %arg5[%c0_2, %c0_3, %c0_4, %c0_5], %4 {strides = array<i32>} : memref<1x2x4x256xf32, #tpu.memory_space<vmem>>, vector<1x1x4x256xf32>,
    %c0_6 = arith.constant 0 : index
    %c0_7 = arith.constant 0 : index
    %c0_8 = arith.constant 0 : index
    %5 = vector.load %arg4[%c0_6, %c0_7, %c0_8] : memref<1x4x256xf32, #tpu.memory_space<vmem>>, vector<1x4x256xf32>
    %6 = vector.shape_cast %5 : vector<1x4x256xf32> to vector<4x256xf32>
    %c0_9 = arith.constant 0 : index
    %c1 = arith.constant 1 : index
    %c0_10 = arith.constant 0 : index
    %c0_11 = arith.constant 0 : index
    %7 = vector.load %arg5[%c0_9, %c1, %c0_10, %c0_11] : memref<1x2x4x256xf32, #tpu.memory_space<vmem>>, vector<1x1x4x256xf32>
    %8 = vector.shape_cast %7 : vector<1x1x4x256xf32> to vector<4x256xf32>
    %9 = vector.shape_cast %6 : vector<4x256xf32> to vector<1x1x4x256xf32>
    tpu.vector_store %arg5[%c0_9, %c1, %c0_10, %c0_11], %9 {strides = array<i32>} : memref<1x2x4x256xf32, #tpu.memory_space<vmem>>, vector<1x1x4x256xf32>,
    return
  }
  func.func @transform_0(%arg0: i32, %arg1: i32, %arg2: i32) -> (i32, i32, i32) {
    %c0_i32 = arith.constant 0 : i32
    return %arg0, %arg1, %arg2 : i32, i32, i32
  }
  func.func @transform_1(%arg0: i32, %arg1: i32, %arg2: i32) -> (i32, i32, i32) {
    %c0_i32 = arith.constant 0 : i32
    return %arg0, %arg1, %arg2 : i32, i32, i32
  }
  func.func @transform_2(%arg0: i32, %arg1: i32, %arg2: i32) -> (i32, i32, i32, i32) {
    %c0_i32 = arith.constant 0 : i32
    %c0_i32_0 = arith.constant 0 : i32
    return %arg0, %c0_i32, %arg1, %arg2 : i32, i32, i32, i32
  }
}

</mosaic_0001>

<llo_original>
// kernel: tpu_custom_call.1
$region0: #{tpu_custom_call.1}
  #allocation0 [shape = 'u32[]', space=smem, size = 0x4, offset = 0x4, fixed_abs, tag = 'smem constant byte address 0x4 - core index']
  #allocation1 [shape = 'u32[144,128]{1,0:T(1,128)}', space=vmem, size = 0x12000, scoped, tag = 'internal scratch']
  %s0 = inlined_call_operand.hbm [shape: f32[2,4,256], index: 0, kind: input, shape index: {}]
  %s1 = inlined_call_operand.hbm [shape: f32[2,4,256], index: 1, kind: input, shape index: {}]
  %s2 = inlined_call_operand.hbm [shape: f32[2,2,4,256], index: 2, kind: output, shape index: {}]
  %s3 = sld [smem:[#allocation0]]
  $region49: #{tpu_custom_call.1} parent=0
    _
  %s5 = ssub.s32 1, %s3
  %s6 = scalar_select 0, %s5, %s3
  $region1: #{tpu_custom_call.1} parent=0
    #allocation2 [shape = 'u8[8192]{0}', space=vmem, size = 0x2000, scoped, tag = 'input window, operand 0']
    #allocation3 [shape = 's32[2]{0}', space=sflag, size = 0x8, scoped, tag = 'scoped memory for tpu_custom_call.1']
    #allocation4 [shape = 's32[2]{0}', space=sflag, size = 0x8, scoped, tag = 'scoped memory for tpu_custom_call.1']
    #allocation5 [shape = 'u8[8192]{0}', space=vmem, size = 0x2000, scoped, tag = 'input window, operand 1']
    #allocation6 [shape = 's32[2]{0}', space=sflag, size = 0x8, scoped, tag = 'scoped memory for tpu_custom_call.1']
    #allocation7 [shape = 'u8[16384]{0}', space=vmem, size = 0x4000, scoped, tag = 'output window, operand 0']
    %7 = vsyncpa [#allocation3], 0
    %s8 = scalar_lea.sflag [#allocation3], 1
    %9 = vsyncpa %s8, 0
    %10 = vsyncpa [#allocation6], 0
    %s11 = scalar_lea.sflag [#allocation6], 1
    %12 = vsyncpa %s11, 0
    %13 = vsyncpa [#allocation4], 0
    %s14 = scalar_lea.sflag [#allocation4], 1
    %15 = vsyncpa %s14, 0
    loop: start=0, step=1, limit=4
    $region2: #{tpu_custom_call.1} parent=1 // loop_pre_header
      _
    $region3: #{tpu_custom_call.1} parent=1 // loop_header
      %s17 = sphi 0, %s21
      %p18 = scmp.ge.s32.totalorder %s17, 4
      %s24 = sphi 0, %s43
      %s25 = sphi 0, %s39
      %s26 = sphi 0, %s35
      %s27 = sphi 0, %s24
      %s28 = sphi 0, %s25
      %s29 = sphi 0, %s26
      %s30 = sphi 0, %s27
      %s31 = sphi 0, %s28
      %s32 = sphi 0, %s29
      %s50 = sphi 0, %s52
      %s53 = sphi 0, %s50
      %s54 = sphi 0, %s53
      %s70 = sphi 0, %s54
      %s80 = sphi 0, %s82
      %s83 = sphi 0, %s80
      %s84 = sphi 0, %s83
      %s100 = sphi 0, %s84
      %s110 = sphi 0, %s112
      %s113 = sphi 0, %s110
      %s114 = sphi 0, %s113
      %s130 = sphi 0, %s114
    $region4: #{tpu_custom_call.1} parent=1 // loop_header_branch
      %20 = sbr.rel (%p18) target = $region8
    $region5: #{tpu_custom_call.1} parent=1 // loop_body
      %s22 = ssub.s32 %s17, 1
      %s23 = ssub.s32 %s17, 2
      %s33 = sadd.s32 1, %s26
      %p34 = scmp.ge.s32.totalorder %s33, 1
      %s35 = scalar_select %p34, 0, %s33
      %s36 = sadd.s32 1, %s25
      %s37 = scalar_select %p34, %s36, %s25
      %p38 = scmp.ge.s32.totalorder %s37, 1
      %s39 = scalar_select %p38, 0, %s37
      %s40 = sadd.s32 1, %s24
      %s41 = scalar_select %p38, %s40, %s24
      %p42 = scmp.ge.s32.totalorder %s41, 2
      %s43 = scalar_select %p42, 0, %s41
      %s44 = ssub.s32 %s24, %s43
      %s45 = ssub.s32 %s25, %s39
      %s46 = sor.u32 %s44, %s45
      %s47 = ssub.s32 %s26, %s35
      %s48 = sor.u32 %s46, %s47
      %p49 = scmp.eq.s32.totalorder %s48, 0
      %s51 = sadd.s32 %s50, 1
      %s52 = scalar_select %p49, %s50, %s51
      %p55 = pneg %p49
      %p56 = scmp.eq.s32.totalorder %s17, 1
      %p57 = por %p55, %p56
      %p58 = scmp.ne.s32.totalorder %s50, %s53
      %p59 = scmp.eq.s32.totalorder %s17, 0
      %p60 = por %p58, %p59
      %p61 = scmp.ne.s32.totalorder %s50, %s53
      %p62 = scmp.eq.s32.totalorder %s22, 1
      %p63 = por %p61, %p62
      %p64 = scmp.ne.s32.totalorder %s53, %s54
      %p65 = scmp.eq.s32.totalorder %s22, 0
      %p66 = por %p64, %p65
      %p67 = scmp.ne.s32.totalorder %s53, %s54
      %p68 = scmp.eq.s32.totalorder %s23, 1
      %p69 = por %p67, %p68
      %p71 = scmp.ne.s32.totalorder %s54, %s70
      %p72 = scmp.eq.s32.totalorder %s23, 0
      %p73 = por %p71, %p72
      %s74 = ssub.s32 %s24, %s43
      %s75 = ssub.s32 %s25, %s39
      %s76 = sor.u32 %s74, %s75
      %s77 = ssub.s32 %s26, %s35
      %s78 = sor.u32 %s76, %s77
      %p79 = scmp.eq.s32.totalorder %s78, 0
      %s81 = sadd.s32 %s80, 1
      %s82 = scalar_select %p79, %s80, %s81
      %p85 = pneg %p79
      %p86 = scmp.eq.s32.totalorder %s17, 1
      %p87 = por %p85, %p86
      %p88 = scmp.ne.s32.totalorder %s80, %s83
      %p89 = scmp.eq.s32.totalorder %s17, 0
      %p90 = por %p88, %p89
      %p91 = scmp.ne.s32.totalorder %s80, %s83
      %p92 = scmp.eq.s32.totalorder %s22, 1
      %p93 = por %p91, %p92
      %p94 = scmp.ne.s32.totalorder %s83, %s84
      %p95 = scmp.eq.s32.totalorder %s22, 0
      %p96 = por %p94, %p95
      %p97 = scmp.ne.s32.totalorder %s83, %s84
      %p98 = scmp.eq.s32.totalorder %s23, 1
      %p99 = por %p97, %p98
      %p101 = scmp.ne.s32.totalorder %s84, %s100
      %p102 = scmp.eq.s32.totalorder %s23, 0
      %p103 = por %p101, %p102
      %s104 = ssub.s32 %s24, %s43
      %s105 = ssub.s32 %s25, %s39
      %s106 = sor.u32 %s104, %s105
      %s107 = ssub.s32 %s26, %s35
      %s108 = sor.u32 %s106, %s107
      %p109 = scmp.eq.s32.totalorder %s108, 0
      %s111 = sadd.s32 %s110, 1
      %s112 = scalar_select %p109, %s110, %s111
      %p115 = pneg %p109
      %p116 = scmp.eq.s32.totalorder %s17, 1
      %p117 = por %p115, %p116
      %p118 = scmp.ne.s32.totalorder %s110, %s113
      %p119 = scmp.eq.s32.totalorder %s17, 0
      %p120 = por %p118, %p119
      %p121 = scmp.ne.s32.totalorder %s110, %s113
      %p122 = scmp.eq.s32.totalorder %s22, 1
      %p123 = por %p121, %p122
      %p124 = scmp.ne.s32.totalorder %s113, %s114
      %p125 = scmp.eq.s32.totalorder %s22, 0
      %p126 = por %p124, %p125
      %p127 = scmp.ne.s32.totalorder %s113, %s114
      %p128 = scmp.eq.s32.totalorder %s23, 1
      %p129 = por %p127, %p128
      %p131 = scmp.ne.s32.totalorder %s114, %s130
      %p132 = scmp.eq.s32.totalorder %s23, 0
      %p133 = por %p131, %p132
      %p134 = scmp.le.s32.totalorder 1, %s17
      %p135 = scmp.lt.s32.totalorder %s17, 3
      %p136 = pnand %p134, %p135
      %p137 = pneg %p136
      // Predicated region
      $region9: #{tpu_custom_call.1} parent=5 // pred_check
        _
      $region10: #{tpu_custom_call.1} parent=5 // pred_check_branch
        %139 = sbr.rel (%p136) target = $region12
      $region11: #{tpu_custom_call.1} parent=5 // pred_region
        %s140 = ssub.s32 %s17, 1
      $region12: #{tpu_custom_call.1} parent=5 // pred_fallthru
        _
      %p141 = scmp.lt.s32.totalorder %s17, 2
      // Predicated region
      $region13: #{tpu_custom_call.1} parent=5 // pred_check
        %p142 = pneg %p141
      $region14: #{tpu_custom_call.1} parent=5 // pred_check_branch
        %144 = sbr.rel (%p142) target = $region16
      $region15: #{tpu_custom_call.1} parent=5 // pred_region
        // Predicated region
        $region17: #{tpu_custom_call.1} parent=15 // pred_check
          %p145 = pneg %p60
        $region18: #{tpu_custom_call.1} parent=15 // pred_check_branch
          %147 = sbr.rel (%p145) target = $region20
        $region19: #{tpu_custom_call.1} parent=15 // pred_region
          %s148 = sand.u32 %s50, 1
          %s149 = scalar_lea.sflag [#allocation3], %s148
          %s150 = sand.u32 %s50, 1
          %s151 = smul.addr %s150, 8
          %s152 = scalar_lea.vmem [#allocation2], %s151
          %s153 = smul.u32 2, %s26
          %s155 = ssub.s32 128, 128
          %156 = vsyncadd %s149, %s155
          %s157 = smul.addr %s25, 2
          %s158 = sadd.s32 %s153, %s157
          %s159 = smul.addr %s24, 2
          %s160 = sadd.s32 %s158, %s159
          %s161 = smul.addr %s160, 64
          %s162 = scalar_lea.hbm %s0, %s161
          %s164 = sshll.u32 %s152, 4
          %s165 = int_to_ptr.vmem [resolvable:$true] %s164
          %167 = dma.hbm_to_vmem [thread:$0]  %s162, 128, %s165, %s149
        $region20: #{tpu_custom_call.1} parent=15 // pred_fallthru
          _
        // Predicated region
        $region21: #{tpu_custom_call.1} parent=15 // pred_check
          %p168 = pneg %p90
        $region22: #{tpu_custom_call.1} parent=15 // pred_check_branch
          %170 = sbr.rel (%p168) target = $region24
        $region23: #{tpu_custom_call.1} parent=15 // pred_region
          %s171 = sand.u32 %s80, 1
          %s172 = scalar_lea.sflag [#allocation6], %s171
          %s173 = sand.u32 %s80, 1
          %s174 = smul.addr %s173, 8
          %s175 = scalar_lea.vmem [#allocation5], %s174
          %s176 = smul.u32 2, %s26
          %s178 = ssub.s32 128, 128
          %179 = vsyncadd %s172, %s178
          %s180 = smul.addr %s25, 2
          %s181 = sadd.s32 %s176, %s180
          %s182 = smul.addr %s24, 2
          %s183 = sadd.s32 %s181, %s182
          %s184 = smul.addr %s183, 64
          %s185 = scalar_lea.hbm %s1, %s184
          %s187 = sshll.u32 %s175, 4
          %s188 = int_to_ptr.vmem [resolvable:$true] %s187
          %190 = dma.hbm_to_vmem [thread:$0]  %s185, 128, %s188, %s172
        $region24: #{tpu_custom_call.1} parent=15 // pred_fallthru
          _
      $region16: #{tpu_custom_call.1} parent=5 // pred_fallthru
        _
      %p191 = scmp.le.s32.totalorder 1, %s17
      %p192 = scmp.lt.s32.totalorder %s17, 3
      %p193 = pnand %p191, %p192
      %p194 = pneg %p193
      // Predicated region
      $region25: #{tpu_custom_call.1} parent=5 // pred_check
        _
      $region26: #{tpu_custom_call.1} parent=5 // pred_check_branch
        %196 = sbr.rel (%p193) target = $region28
      $region27: #{tpu_custom_call.1} parent=5 // pred_region
        %s197 = ssub.s32 %s17, 1
        %s198 = sand.u32 %s53, 1
        %s199 = scalar_lea.sflag [#allocation3], %s198
        %s200 = sand.u32 %s53, 1
        %s201 = smul.addr %s200, 8
        %s202 = scalar_lea.vmem [#allocation2], %s201
        // Predicated region
        $region29: #{tpu_custom_call.1} parent=27 // pred_check
          %p203 = pneg %p66
        $region30: #{tpu_custom_call.1} parent=27 // pred_check_branch
          %205 = sbr.rel (%p203) target = $region32
        $region31: #{tpu_custom_call.1} parent=27 // pred_region
          %206 = dma.done %s199, 128
        $region32: #{tpu_custom_call.1} parent=27 // pred_fallthru
          _
        %s207 = sand.u32 %s83, 1
        %s208 = scalar_lea.sflag [#allocation6], %s207
        %s209 = sand.u32 %s83, 1
        %s210 = smul.addr %s209, 8
        %s211 = scalar_lea.vmem [#allocation5], %s210
        // Predicated region
        $region33: #{tpu_custom_call.1} parent=27 // pred_check
          %p212 = pneg %p96
        $region34: #{tpu_custom_call.1} parent=27 // pred_check_branch
          %214 = sbr.rel (%p212) target = $region36
        $region35: #{tpu_custom_call.1} parent=27 // pred_region
          %215 = dma.done %s208, 128
        $region36: #{tpu_custom_call.1} parent=27 // pred_fallthru
          _
        %s216 = sand.u32 %s53, 1
        %s217 = scalar_lea.sflag [#allocation3], %s216
        %s218 = sand.u32 %s53, 1
        %s219 = smul.addr %s218, 8
        %s220 = scalar_lea.vmem [#allocation2], %s219
        %p221 = pneg %p66
        %p222 = pneg %p63
        %s223 = sand.u32 %s83, 1
        %s224 = scalar_lea.sflag [#allocation6], %s223
        %s225 = sand.u32 %s83, 1
        %s226 = smul.addr %s225, 8
        %s227 = scalar_lea.vmem [#allocation5], %s226
        %p228 = pneg %p96
        %p229 = pneg %p93
        %p230 = pneg %p126
        %p231 = pneg %p123
        %s232 = sand.u32 %s113, 1
        %s233 = scalar_lea.sflag [#allocation4], %s232
        %s234 = sand.u32 %s113, 1
        %s235 = smul.addr %s234, 16
        %s236 = scalar_lea.vmem [#allocation7], %s235
        %s237 = smul.u32 2, %s29
        %s238 = smul.u32 2, %s29
        %s239 = smul.u32 2, %s29
        %v240 = vld [vmem:[%s202] sm:$0xff]
        %241 = vst [vmem:[%s236] sm:$0xff] %v240
        %v242 = vld [vmem:[%s211] sm:$0xff]
        %s243 = scalar_lea.vmem %s236, 8 [#allocation7]
        %244 = vst [vmem:[%s243] sm:$0xff] %v242
        %s245 = sand.u32 %s113, 1
        %s246 = scalar_lea.sflag [#allocation4], %s245
        %s247 = sand.u32 %s113, 1
        %s248 = smul.addr %s247, 16
        %s249 = scalar_lea.vmem [#allocation7], %s248
        // Predicated region
        $region37: #{tpu_custom_call.1} parent=27 // pred_check
          %p250 = pneg %p123
        $region38: #{tpu_custom_call.1} parent=27 // pred_check_branch
          %252 = sbr.rel (%p250) target = $region40
        $region39: #{tpu_custom_call.1} parent=27 // pred_region
          %s253 = smul.u32 2, %s29
          %s255 = ssub.s32 256, 256
          %256 = vsyncadd %s246, %s255
          %s257 = smul.addr %s28, 2
          %s258 = sadd.s32 %s253, %s257
          %s259 = smul.addr %s27, 4
          %s260 = sadd.s32 %s258, %s259
          %s261 = smul.addr %s260, 64
          %s262 = scalar_lea.hbm %s2, %s261
          %s263 = sshll.u32 %s249, 4
          %s264 = int_to_ptr.vmem [resolvable:$true] %s263
          %269 = dma.vmem_to_hbm [thread:$0]  %s264, 256, %s262, %s246, 128, 128, 8
        $region40: #{tpu_custom_call.1} parent=27 // pred_fallthru
          _
      $region28: #{tpu_custom_call.1} parent=5 // pred_fallthru
        _
      %p270 = scmp.le.s32.totalorder 2, %s17
      // Predicated region
      $region41: #{tpu_custom_call.1} parent=5 // pred_check
        %p271 = pneg %p270
      $region42: #{tpu_custom_call.1} parent=5 // pred_check_branch
        %273 = sbr.rel (%p271) target = $region44
      $region43: #{tpu_custom_call.1} parent=5 // pred_region
        %s274 = ssub.s32 %s17, 2
        // Predicated region
        $region45: #{tpu_custom_call.1} parent=43 // pred_check
          %p275 = pneg %p129
        $region46: #{tpu_custom_call.1} parent=43 // pred_check_branch
          %277 = sbr.rel (%p275) target = $region48
        $region47: #{tpu_custom_call.1} parent=43 // pred_region
          %s278 = sand.u32 %s114, 1
          %s279 = scalar_lea.sflag [#allocation4], %s278
          %s280 = sand.u32 %s114, 1
          %s281 = smul.addr %s280, 16
          %s282 = scalar_lea.vmem [#allocation7], %s281
          %283 = dma.done %s279, 256
        $region48: #{tpu_custom_call.1} parent=43 // pred_fallthru
          _
      $region44: #{tpu_custom_call.1} parent=5 // pred_fallthru
        _
    $region6: #{tpu_custom_call.1} parent=1 // loop_footer
      %s21 = sadd.s32 1, %s17
    $region7: #{tpu_custom_call.1} parent=1 // loop_footer_branch
      %16 = sbr.rel target = $region3
    $region8: #{tpu_custom_call.1} parent=1 // loop_exit
      _
    %284 = vsyncpa [#allocation3], 1
    %s285 = scalar_lea.sflag [#allocation3], 1
    %286 = vsyncpa %s285, 1
    %287 = vsyncpa [#allocation6], 1
    %s288 = scalar_lea.sflag [#allocation6], 1
    %289 = vsyncpa %s288, 1
    %290 = vsyncpa [#allocation4], 1
    %s291 = scalar_lea.sflag [#allocation4], 1
    %292 = vsyncpa %s291, 1

</llo_original>
